<compile_context>
chip_gen: v7x
topology: tpu7x:2x2x1
jax: 0.10.0
libtpu: 0.0.40
codegen_flags: <defaults>
</compile_context>

<pallas_src>
import functools

import jax
import jax.numpy as jnp
from jax.experimental import pallas as pl
from jax.experimental.pallas import tpu as pltpu


def _round_up(n: int, m: int) -> int:
    return ((n + m - 1) // m) * m


def encoder_kernel(x_ref, w1_ref, b1_ref, w2_ref, b2_ref, out_ref):
    """One batch tile: out = relu(x @ w1 + b1) @ w2 + b2 (natural shapes)."""
    x = x_ref[...]                          # (TILE_B, D_in)   f32
    w1 = w1_ref[...]                        # (D_in, H)        f32
    b1 = b1_ref[...]                        # (1, H)           f32

    d_in = x.shape[1]
    if d_in <= 8:
        # fc1 on the VPU: K is tiny (e.g. 2); an MXU pass would be ~1% utilized.
        h = b1                              # (1, H) broadcasts to (TILE_B, H)
        for d in range(d_in):               # static unroll over the tiny contraction
            h = h + x[:, d:d + 1] * w1[d:d + 1, :]
    else:
        h = jnp.dot(x, w1, preferred_element_type=jnp.float32) + b1
    h = jnp.maximum(h, 0.0)                 # ReLU, (TILE_B, H)

    # fc2 on the MXU: K = hidden, N = out_dim (narrow -> masked stores, but the
    # output block is only out_dim lanes wide so HBM writeback is minimal).
    o = jnp.dot(h, w2_ref[...], preferred_element_type=jnp.float32) + b2_ref[...]
    out_ref[...] = o.astype(out_ref.dtype)


@functools.partial(jax.jit, static_argnames=("tile_b",))
def encoder_forward(x, w1, b1, w2, b2, *, tile_b=1024):
    """Pallas TPU implementation of Encoder.forward.

    x : (B, input_dim) float32
    w1: (input_dim, hidden_dim), b1: (1, hidden_dim)
    w2: (hidden_dim, output_dim), b2: (1, output_dim)
    Returns (B, output_dim) float32.
    """
    B, d_in = x.shape
    hidden = w1.shape[1]
    out_dim = w2.shape[1]

    # Batch tile selection:
    #  - B <= 8: single full-extent block (block dim == array dim is legal).
    #  - B > 8 : tile is a multiple of 8, sized ~B/2 so there are always >= 2
    #            grid steps (feeds both v7x TensorCores), capped at tile_b
    #            (1024-2048 is a good range) to amortize per-step overhead
    #            at large B without blowing up the (tile, hidden) intermediate.
    if B <= 8:
        tile = B
    else:
        tile = min(tile_b, max(8, _round_up(pl.cdiv(B, 2), 8)))

    grid = (pl.cdiv(B, tile),)

    flops = 2 * B * (d_in * hidden + hidden * out_dim)
    bytes_accessed = 4 * (B * d_in + d_in * hidden + hidden
                          + hidden * out_dim + out_dim + B * out_dim)

    return pl.pallas_call(
        encoder_kernel,
        out_shape=jax.ShapeDtypeStruct((B, out_dim), x.dtype),
        grid=grid,
        in_specs=[
            # Batch-tiled activation (ragged last tile handled by Pallas).
            pl.BlockSpec((tile, d_in), lambda i: (i, 0)),
            # Weights/biases: constant index_map -> VMEM-resident across the grid.
            pl.BlockSpec((d_in, hidden), lambda i: (0, 0)),
            pl.BlockSpec((1, hidden), lambda i: (0, 0)),
            pl.BlockSpec((hidden, out_dim), lambda i: (0, 0)),
            pl.BlockSpec((1, out_dim), lambda i: (0, 0)),
        ],
        out_specs=pl.BlockSpec((tile, out_dim), lambda i: (i, 0)),
        compiler_params=pltpu.CompilerParams(
            dimension_semantics=("parallel",),   # batch tiles shard across TCs (v7x)
        ),
        cost_estimate=pl.CostEstimate(
            flops=int(flops), transcendentals=0, bytes_accessed=int(bytes_accessed)),
    )(x, w1, b1, w2, b2)


def init_params(key, input_dim, hidden_dim, output_dim):
    """Deterministic init mimicking nn.Linear's uniform(-1/sqrt(fan_in), 1/sqrt(fan_in))."""
    k1, k2, k3, k4 = jax.random.split(key, 4)
    bound1 = 1.0 / (input_dim ** 0.5)
    bound2 = 1.0 / (hidden_dim ** 0.5)
    w1 = jax.random.uniform(k1, (input_dim, hidden_dim), jnp.float32, -bound1, bound1)
    b1 = jax.random.uniform(k2, (1, hidden_dim), jnp.float32, -bound1, bound1)
    w2 = jax.random.uniform(k3, (hidden_dim, output_dim), jnp.float32, -bound2, bound2)
    b2 = jax.random.uniform(k4, (1, output_dim), jnp.float32, -bound2, bound2)
    return w1, b1, w2, b2


if __name__ == "__main__":
    # Module context: input_dim = data_x.size(1) (VdP state -> 2), hidden_dim = 64,
    # output_dim = nn = 2.
    input_dim, hidden_dim, output_dim = 2, 64, 2

    key = jax.random.PRNGKey(0)
    kx1, kx2, kp = jax.random.split(key, 3)
    w1, b1, w2, b2 = init_params(kp, input_dim, hidden_dim, output_dim)

    def reference(x):
        return jnp.maximum(x @ w1 + b1, 0.0) @ w2 + b2

    # Small batch (single block, no padding anywhere) and a larger batch that is
    # not a multiple of the tile (exercises the 2-step parallel grid and the
    # ragged last tile).
    for kx, batch in ((kx1, 8), (kx2, 1000)):
        x = jax.random.normal(kx, (batch, input_dim), jnp.float32)
        out = encoder_forward(x, w1, b1, w2, b2)
        jax.block_until_ready(out)
        assert out.shape == (batch, output_dim)
        assert jnp.allclose(out, reference(x), atol=1e-5, rtol=1e-5)

    print("KERNEL_OK")
</pallas_src>

<mosaic_0001>
module attributes {stable_mosaic.version = 11 : i64} {
  func.func @encoder_kernel(%arg0: i32, %arg1: memref<8x2xf32, #tpu.memory_space<vmem>>, %arg2: memref<2x64xf32, #tpu.memory_space<vmem>>, %arg3: memref<1x64xf32, #tpu.memory_space<vmem>>, %arg4: memref<64x2xf32, #tpu.memory_space<vmem>>, %arg5: memref<1x2xf32, #tpu.memory_space<vmem>>, %arg6: memref<8x2xf32, #tpu.memory_space<vmem>>) attributes {dimension_semantics = [#tpu.dimension_semantics<parallel>], iteration_bounds = array<i64: 1>, scalar_prefetch = 0 : i64, scratch_operands = 0 : i64, tpu.core_type = #tpu.core_type<tc>, window_params = [{transform_indices = @transform_0, window_bounds = array<i64: 8, 2>}, {pipeline_mode = #tpu.pipeline_mode<synchronous>, transform_indices = @transform_1, window_bounds = array<i64: 2, 64>}, {pipeline_mode = #tpu.pipeline_mode<synchronous>, transform_indices = @transform_2, window_bounds = array<i64: 1, 64>}, {pipeline_mode = #tpu.pipeline_mode<synchronous>, transform_indices = @transform_3, window_bounds = array<i64: 64, 2>}, {pipeline_mode = #tpu.pipeline_mode<synchronous>, transform_indices = @transform_4, window_bounds = array<i64: 1, 2>}, {transform_indices = @transform_5, window_bounds = array<i64: 8, 2>}]} {
    %c0 = arith.constant 0 : index
    %c0_0 = arith.constant 0 : index
    %0 = vector.load %arg1[%c0, %c0_0] : memref<8x2xf32, #tpu.memory_space<vmem>>, vector<8x2xf32>
    %c0_1 = arith.constant 0 : index
    %c0_2 = arith.constant 0 : index
    %1 = vector.load %arg2[%c0_1, %c0_2] : memref<2x64xf32, #tpu.memory_space<vmem>>, vector<2x64xf32>
    %c0_3 = arith.constant 0 : index
    %c0_4 = arith.constant 0 : index
    %2 = vector.load %arg3[%c0_3, %c0_4] : memref<1x64xf32, #tpu.memory_space<vmem>>, vector<1x64xf32>
    %3 = vector.extract_strided_slice %0 {offsets = [0, 0], sizes = [8, 1], strides = [1, 1]} : vector<8x2xf32> to vector<8x1xf32>
    %4 = vector.extract_strided_slice %1 {offsets = [0, 0], sizes = [1, 64], strides = [1, 1]} : vector<2x64xf32> to vector<1x64xf32>
    %5 = vector.broadcast %3 : vector<8x1xf32> to vector<8x64xf32>
    %6 = vector.broadcast %4 : vector<1x64xf32> to vector<8x64xf32>
    %7 = arith.mulf %5, %6 : vector<8x64xf32>
    %8 = vector.broadcast %2 : vector<1x64xf32> to vector<8x64xf32>
    %9 = arith.addf %8, %7 : vector<8x64xf32>
    %10 = vector.extract_strided_slice %0 {offsets = [0, 1], sizes = [8, 1], strides = [1, 1]} : vector<8x2xf32> to vector<8x1xf32>
    %11 = vector.extract_strided_slice %1 {offsets = [1, 0], sizes = [1, 64], strides = [1, 1]} : vector<2x64xf32> to vector<1x64xf32>
    %12 = vector.broadcast %10 : vector<8x1xf32> to vector<8x64xf32>
    %13 = vector.broadcast %11 : vector<1x64xf32> to vector<8x64xf32>
    %14 = arith.mulf %12, %13 : vector<8x64xf32>
    %15 = arith.addf %9, %14 : vector<8x64xf32>
    %cst = arith.constant 0.000000e+00 : f32
    %16 = vector.broadcast %cst : f32 to vector<8x64xf32>
    %17 = arith.maximumf %15, %16 : vector<8x64xf32>
    %c0_5 = arith.constant 0 : index
    %c0_6 = arith.constant 0 : index
    %18 = vector.load %arg4[%c0_5, %c0_6] : memref<64x2xf32, #tpu.memory_space<vmem>>, vector<64x2xf32>
    %cst_7 = arith.constant dense<0.000000e+00> : vector<8x2xf32>
    %19 = tpu.matmul %17, %18, %cst_7 {dimension_numbers = #tpu.dot_dimension_numbers<[1], [0], [0], [1], [0, 0, 1, 1], [], []>} : vector<8x64xf32>, vector<64x2xf32>, vector<8x2xf32> -> vector<8x2xf32>
    %c0_8 = arith.constant 0 : index
    %c0_9 = arith.constant 0 : index
    %20 = vector.load %arg5[%c0_8, %c0_9] : memref<1x2xf32, #tpu.memory_space<vmem>>, vector<1x2xf32>
    %21 = vector.broadcast %20 : vector<1x2xf32> to vector<8x2xf32>
    %22 = arith.addf %19, %21 : vector<8x2xf32>
    %c0_10 = arith.constant 0 : index
    %c0_11 = arith.constant 0 : index
    %23 = vector.load %arg6[%c0_10, %c0_11] : memref<8x2xf32, #tpu.memory_space<vmem>>, vector<8x2xf32>
    tpu.vector_store %arg6[%c0_10, %c0_11], %22 {strides = array<i32>} : memref<8x2xf32, #tpu.memory_space<vmem>>, vector<8x2xf32>,
    return
  }
  func.func @transform_0(%arg0: i32) -> (i32, i32) {
    %c0_i32 = arith.constant 0 : i32
    %c0_i32_0 = arith.constant 0 : i32
    return %arg0, %c0_i32 : i32, i32
  }
  func.func @transform_1(%arg0: i32) -> (i32, i32) {
    %c0_i32 = arith.constant 0 : i32
    %c0_i32_0 = arith.constant 0 : i32
    %c0_i32_1 = arith.constant 0 : i32
    return %c0_i32, %c0_i32_0 : i32, i32
  }
  func.func @transform_2(%arg0: i32) -> (i32, i32) {
    %c0_i32 = arith.constant 0 : i32
    %c0_i32_0 = arith.constant 0 : i32
    %c0_i32_1 = arith.constant 0 : i32
    return %c0_i32, %c0_i32_0 : i32, i32
  }
  func.func @transform_3(%arg0: i32) -> (i32, i32) {
    %c0_i32 = arith.constant 0 : i32
    %c0_i32_0 = arith.constant 0 : i32
    %c0_i32_1 = arith.constant 0 : i32
    return %c0_i32, %c0_i32_0 : i32, i32
  }
  func.func @transform_4(%arg0: i32) -> (i32, i32) {
    %c0_i32 = arith.constant 0 : i32
    %c0_i32_0 = arith.constant 0 : i32
    %c0_i32_1 = arith.constant 0 : i32
    return %c0_i32, %c0_i32_0 : i32, i32
  }
  func.func @transform_5(%arg0: i32) -> (i32, i32) {
    %c0_i32 = arith.constant 0 : i32
    %c0_i32_0 = arith.constant 0 : i32
    return %arg0, %c0_i32 : i32, i32
  }
}

</mosaic_0001>

<llo_original>
// kernel: encoder_forward.1
$region0: #{encoder_forward.1}
  #allocation0 [shape = 'u32[]', space=smem, size = 0x4, offset = 0x4, fixed_abs, tag = 'smem constant byte address 0x4 - core index']
  #allocation1 [shape = 'u32[144,128]{1,0:T(1,128)}', space=vmem, size = 0x12000, scoped, tag = 'internal scratch']
  %s0 = inlined_call_operand.vmem [shape: f32[8,2], index: 0, kind: input, shape index: {}]
  %s1 = inlined_call_operand.vmem [shape: f32[2,64], index: 1, kind: input, shape index: {}]
  %s2 = inlined_call_operand.vmem [shape: f32[1,64], index: 2, kind: input, shape index: {}]
  %s3 = inlined_call_operand.vmem [shape: f32[64,2], index: 3, kind: input, shape index: {}]
  %s4 = inlined_call_operand.vmem [shape: f32[1,2], index: 4, kind: input, shape index: {}]
  %s5 = inlined_call_operand.vmem [shape: f32[8,2], index: 5, kind: output, shape index: {}]
  %s6 = sld [smem:[#allocation0]]
  $region30: #{encoder_forward.1} parent=0
    _
  %s8 = ssub.s32 1, %s6
  %s9 = scalar_select 0, %s8, %s6
  // Predicated region
  $region2: #{encoder_forward.1} parent=0 // pred_check
    _
  $region3: #{encoder_forward.1} parent=0 // pred_check_branch
    %11 = sbr.rel (0) target = $region5
  $region4: #{encoder_forward.1} parent=0 // pred_region
    _
  $region5: #{encoder_forward.1} parent=0 // pred_fallthru
    _
  // Predicated region
  $region6: #{encoder_forward.1} parent=0 // pred_check
    _
  $region7: #{encoder_forward.1} parent=0 // pred_check_branch
    %13 = sbr.rel (0) target = $region9
  $region8: #{encoder_forward.1} parent=0 // pred_region
    _
  $region9: #{encoder_forward.1} parent=0 // pred_fallthru
    _
  // Predicated region
  $region10: #{encoder_forward.1} parent=0 // pred_check
    _
  $region11: #{encoder_forward.1} parent=0 // pred_check_branch
    %15 = sbr.rel (0) target = $region13
  $region12: #{encoder_forward.1} parent=0 // pred_region
    _
  $region13: #{encoder_forward.1} parent=0 // pred_fallthru
    _
  // Predicated region
  $region14: #{encoder_forward.1} parent=0 // pred_check
    _
  $region15: #{encoder_forward.1} parent=0 // pred_check_branch
    %17 = sbr.rel (0) target = $region17
  $region16: #{encoder_forward.1} parent=0 // pred_region
    _
  $region17: #{encoder_forward.1} parent=0 // pred_fallthru
    _
  // Predicated region
  $region18: #{encoder_forward.1} parent=0 // pred_check
    _
  $region19: #{encoder_forward.1} parent=0 // pred_check_branch
    %19 = sbr.rel (0) target = $region21
  $region20: #{encoder_forward.1} parent=0 // pred_region
    _
  $region21: #{encoder_forward.1} parent=0 // pred_fallthru
    _
  %v20 = vld [vmem:[%s0] sm:$0xff]
  %v21 = vld [vmem:[%s1] sm:$0x3]
  %v22 = vld [vmem:[%s2] sm:$0x1]
  %24 = vset.pattern.permute.xlu0 0
  %25 = vperm.xlu0 %24, %v20
  %v26 = vpop.permute.xlu0 %25
  %v28 = vlaneseq
  %v29 = vshrl.u32 %v28, 7
  %v30 = vsub.s32 0, %v29
  %v31 = vrot.slane %v21, %v30
  %v32 = vmul.f32 %v26, %v31
  %v34 = vlaneseq
  %v35 = vshrl.u32 %v34, 7
  %v36 = vsub.s32 0, %v35
  %v37 = vrot.slane %v22, %v36
  %v39 = vadd.f32 %v37, %v32
  %40 = vset.pattern.permute.xlu0 1
  %41 = vperm.xlu0 %40, %v20
  %v42 = vpop.permute.xlu0 %41
  %v44 = vlaneseq
  %v45 = vshrl.u32 %v44, 7
  %v46 = vsub.s32 1, %v45
  %v47 = vrot.slane %v21, %v46
  %v48 = vmul.f32 %v42, %v47
  %v49 = vadd.f32 %v39, %v48
  %v50 = vmax.f32 %v49, 0.0
  %v51 = vld [vmem:[%s3] sm:$0xff]
  %v52 = vld [vmem:[%s3 + $0x8] sm:$0xff]
  %v53 = vld [vmem:[%s3 + $0x10] sm:$0xff]
  %v54 = vld [vmem:[%s3 + $0x18] sm:$0xff]
  %v55 = vld [vmem:[%s3 + $0x20] sm:$0xff]
  %v56 = vld [vmem:[%s3 + $0x28] sm:$0xff]
  %v57 = vld [vmem:[%s3 + $0x30] sm:$0xff]
  %v58 = vld [vmem:[%s3 + $0x38] sm:$0xff]
  %v59 = vld [vmem:[%s4] sm:$0x1]
  %v61 = vlaneseq
  %v62 = vshrl.u32 %v61, 7
  %v63 = vsub.s32 0, %v62
  %v64 = vrot.slane %v59, %v63
  %vm66 = vcmask 523264
  %v68 = vsel %vm66, %v50, 0
  %70 = vmatprep.subr.mxu0 0.0
  %71 = vmatpush1.msra.mxu0 %v51
  %72 = vmatprep.subr.mxu0 0.0
  %73 = vmatpush1.msra.mxu0 %v52
  %74 = vmatprep.subr.mxu0 0.0
  %75 = vmatpush1.msra.mxu0 %v53
  %76 = vmatprep.subr.mxu0 0.0
  %77 = vmatpush1.msra.mxu0 %v54
  %78 = vmatprep.subr.mxu0 0.0
  %79 = vmatpush1.msra.mxu0 %v55
  %80 = vmatprep.subr.mxu0 0.0
  %81 = vmatpush1.msra.mxu0 %v56
  %82 = vmatprep.subr.mxu0 0.0
  %83 = vmatpush1.msra.mxu0 %v57
  %84 = vmatprep.subr.mxu0 0.0
  %85 = vmatpush1.msra.mxu0 %v58
  %86 = vmatprep.subr.mxu0 0.0
  %87 = vmatpush1.msra.mxu0 0.0
  %88 = vmatprep.subr.mxu0 0.0
  %89 = vmatpush1.msra.mxu0 0.0
  %90 = vmatprep.subr.mxu0 0.0
  %91 = vmatpush1.msra.mxu0 0.0
  %92 = vmatprep.subr.mxu0 0.0
  %93 = vmatpush1.msra.mxu0 0.0
  %94 = vmatprep.subr.mxu0 0.0
  %95 = vmatpush1.msra.mxu0 0.0
  %96 = vmatprep.subr.mxu0 0.0
  %97 = vmatpush1.msra.mxu0 0.0
  %98 = vmatprep.subr.mxu0 0.0
  %99 = vmatpush1.msra.mxu0 0.0
  %100 = vmatprep.subr.mxu0 0.0
  %101 = vmatpush1.msra.mxu0 0.0
  %102 = vmatprep.subr.mxu0 0.0
  %103 = vmatpush1.msra.mxu0 0.0
  %104 = vmatprep.subr.mxu0 0.0
  %105 = vmatpush1.msra.mxu0 0.0
  %106 = vmatprep.subr.mxu0 0.0
  %107 = vmatpush1.msra.mxu0 0.0
  %108 = vmatprep.subr.mxu0 0.0
  %109 = vmatpush1.msra.mxu0 0.0
  %110 = vmatprep.subr.mxu0 0.0
  %111 = vmatpush1.msra.mxu0 0.0
  %112 = vmatprep.subr.mxu0 0.0
  %113 = vmatpush1.msra.mxu0 0.0
  %114 = vmatprep.subr.mxu0 0.0
  %115 = vmatpush1.msra.mxu0 0.0
  %116 = vmatprep.subr.mxu0 0.0
  %117 = vmatpush1.msra.mxu0 0.0
  %118 = vmatprep.subr.mxu0 0.0
  %119 = vmatpush1.msra.mxu0 0.0
  %120 = vmatprep.subr.mxu0 0.0
  %121 = vmatpush1.msra.mxu0 0.0
  %122 = vmatprep.subr.mxu0 0.0
  %123 = vmatpush1.msra.mxu0 0.0
  %124 = vmatprep.subr.mxu0 0.0
  %125 = vmatpush1.msra.mxu0 0.0
  %126 = vmatprep.subr.mxu0 0.0
  %127 = vmatpush1.msra.mxu0 0.0
  %128 = vmatprep.subr.mxu0 0.0
  %129 = vmatpush1.msra.mxu0 0.0
  %130 = vmatprep.subr.mxu0 0.0
  %131 = vmatpush1.msra.mxu0 0.0
  %132 = vmatprep.subr.mxu0 0.0
  %133 = vmatpush1.msra.mxu0 0.0
  %134 = vmatprep.mubr.f32.mxu0 0.0
  %135 = vmatmul.mubr.f32.gmra.mrb[0].mxu0 %v68
  %v136 = vpop.f32.mrb[0].mxu0
  %v137 = vadd.f32 %v64, %v136
  %v138 = vpop.f32.mrb[0].mxu0
  %139 = vdwg.mxu0
  %vm140 = vcmask 15360
  %141 = vst.msk [vmem:[%s5] sm:$0xff] %vm140, %v137
  // Predicated region
  $region22: #{encoder_forward.1} parent=0 // pred_check
    _
  $region23: #{encoder_forward.1} parent=0 // pred_check_branch
    %143 = sbr.rel (0) target = $region25
  $region24: #{encoder_forward.1} parent=0 // pred_region
    _
  $region25: #{encoder_forward.1} parent=0 // pred_fallthru
    _
  // Predicated region
  $region26: #{encoder_forward.1} parent=0 // pred_check
    _
  $region27: #{encoder_forward.1} parent=0 // pred_check_branch
    %145 = sbr.rel (0) target = $region29
  $region28: #{encoder_forward.1} parent=0 // pred_region
    _
  $region29: #{encoder_forward.1} parent=0 // pred_fallthru
    _

</llo_original>
